<compile_context>
chip_gen: v5e
topology: v5e:2x2
jax: 0.10.0
libtpu: 0.0.40
codegen_flags: <defaults>
</compile_context>

<pallas_src>
import functools

import jax
import jax.numpy as jnp
from jax.experimental import pallas as pl
from jax.experimental.pallas import tpu as pltpu


def _round_up(x: int, m: int) -> int:
    return ((x + m - 1) // m) * m


def _vmem_limit_bytes() -> int:
    """Generation-aware scoped-VMEM limit: ~3/4 of physical capacity, capped at
    96 MiB (v5e/v6e: 128 MiB physical; v7x: 64 MiB per TensorCore)."""
    cap = 64 * 1024 * 1024  # conservative default == v7x physical
    try:
        info = pltpu.get_tpu_info()
        cap = int(getattr(info, "vmem_capacity_bytes", cap)) or cap
    except Exception:
        pass
    return max(32 * 1024 * 1024, min(96 * 1024 * 1024, (cap * 3) // 4))


def _pick_tile_n(n_rows: int, n_classes: int, in_itemsize: int,
                 vmem_budget_bytes: int, max_tile_n: int | None = None) -> int:
    """Largest batch tile such that (2 inputs x 2 pipeline buffers) of the raw
    input blocks PLUS ~5 live f32 C-wide temporaries (logits/shifted/e/y/term)
    fit inside the VMEM budget. Multiple of 8 rows (sublane granularity)."""
    bytes_per_row = n_classes * (2 * 2 * in_itemsize + 5 * 4)
    t = vmem_budget_bytes // max(1, bytes_per_row)
    cap = 4096 if max_tile_n is None else max_tile_n
    t = max(8, min(cap, t))
    t = min(t, _round_up(n_rows, 8))          # don't over-allocate for tiny N
    return max(8, (t // 8) * 8)


def _soft_label_loss_kernel(y_ref, yp_ref, out_ref, *, tile_n: int,
                            n_classes: int, n_rows: int, tiles_per_shard: int,
                            needs_mask: bool):
    s = pl.program_id(0)          # megacore shard axis ("parallel")
    i = pl.program_id(1)          # reduction axis over batch tiles ("arbitrary")

    # Per-shard lane-dense resident accumulator: the (8, C) output block.
    @pl.when(i == 0)
    def _():
        out_ref[...] = jnp.zeros_like(out_ref)

    logits = yp_ref[...].astype(jnp.float32)              # (tile_n, C)

    # Numerically stable log-softmax. The row max is the ONLY cross-lane (XLU)
    # reduction in the hot loop.
    m = jnp.max(logits, axis=-1, keepdims=True)            # XLU
    shifted = logits - m                                    # VPU
    e = jnp.exp(shifted)                                    # EUP

    # Class-axis exp-sum as an MXU matvec (MXU is otherwise idle); HIGHEST
    # precision keeps lse f32-exact instead of single-pass bf16 truncation.
    ones_c = jnp.ones((n_classes, 1), jnp.float32)
    sum_e = jnp.dot(e, ones_c, preferred_element_type=jnp.float32,
                    precision=jax.lax.Precision.HIGHEST)    # (tile_n, 1)
    lse = jnp.log(sum_e)                                    # EUP

    y = y_ref[...].astype(jnp.float32)                      # (tile_n, C)
    # -(y * log_probs) = y * (lse - shifted), elementwise.
    term = y * (lse - shifted)                              # VPU, (tile_n, C)

    if needs_mask:
        # Ragged last block: rows at/after `valid` hold unspecified data (no
        # wrapper-side padding anymore). Select-to-zero before accumulating so
        # garbage logits (inf/NaN after exp/log) can't poison the partials.
        global_tile = s * tiles_per_shard + i
        valid = n_rows - global_tile * tile_n               # scalar, may be <= 0
        row = jax.lax.broadcasted_iota(jnp.int32, (tile_n, 1), 0)
        term = jnp.where(row < valid, term, 0.0)

    # Layout-preserving sublane fold (tile_n, C) -> (8, C): plain VPU vreg adds,
    # exact f32, keeps the accumulate a full-tile unmasked store.
    partial = term.reshape(tile_n // 8, 8, n_classes).sum(axis=0)
    out_ref[...] += partial


def supervised_soft_label_loss(y: jax.Array, y_pred: jax.Array, *,
                               max_tile_n: int | None = None) -> jax.Array:
    """-(y * log_softmax(y_pred, axis=1)).sum(axis=1).mean() for (N, C) inputs.

    Any floating input dtype (e.g. bf16) is accepted; compute is f32.
    """
    assert y.shape == y_pred.shape and y.ndim == 2
    N, C = y.shape
    in_itemsize = max(jnp.dtype(y.dtype).itemsize, jnp.dtype(y_pred.dtype).itemsize)

    vmem_limit = _vmem_limit_bytes()
    tile_n = _pick_tile_n(N, C, in_itemsize,
                          vmem_budget_bytes=vmem_limit - 8 * 1024 * 1024,
                          max_tile_n=max_tile_n)
    total_tiles = pl.cdiv(N, tile_n)
    # Megacore shard (helps on v7x, harmless elsewhere) only when it splits
    # evenly, so neither TensorCore gets a padding-only tile.
    num_shards = 2 if (total_tiles >= 2 and total_tiles % 2 == 0) else 1
    tiles_per_shard = total_tiles // num_shards
    needs_mask = (N % tile_n) != 0

    kernel = functools.partial(
        _soft_label_loss_kernel, tile_n=tile_n, n_classes=C, n_rows=N,
        tiles_per_shard=tiles_per_shard, needs_mask=needs_mask)

    partials = pl.pallas_call(
        kernel,
        out_shape=jax.ShapeDtypeStruct((num_shards, 8, C), jnp.float32),
        grid_spec=pltpu.PrefetchScalarGridSpec(
            num_scalar_prefetch=0,
            grid=(num_shards, tiles_per_shard),
            in_specs=[
                pl.BlockSpec((tile_n, C),
                             lambda s, i: (s * tiles_per_shard + i, 0)),  # y
                pl.BlockSpec((tile_n, C),
                             lambda s, i: (s * tiles_per_shard + i, 0)),  # y_pred
            ],
            out_specs=pl.BlockSpec((None, 8, C), lambda s, i: (s, 0, 0)),
        ),
        compiler_params=pltpu.CompilerParams(
            dimension_semantics=("parallel", "arbitrary"),
            vmem_limit_bytes=vmem_limit,
        ),
    )(y, y_pred)

    # Tiny cross-shard / cross-lane epilogue in XLA; multiply by 1/N (the mean).
    return jnp.sum(partials) * jnp.float32(1.0 / N)


def _reference_loss(y, y_pred):
    log_probs = jax.nn.log_softmax(y_pred, axis=1)
    return -(y * log_probs).sum(axis=1).mean()


if __name__ == "__main__":
    key = jax.random.PRNGKey(0)
    keys = jax.random.split(key, 8)

    # Case 1: small tile-friendly shape (single tile, single shard, no mask).
    N1, C1 = 16, 128
    y1 = jax.nn.softmax(jax.random.normal(keys[0], (N1, C1), jnp.float32), axis=1)
    p1 = jax.random.normal(keys[1], (N1, C1), jnp.float32)
    out1 = jax.block_until_ready(supervised_soft_label_loss(y1, p1))
    ref1 = _reference_loss(y1, p1)
    assert jnp.allclose(out1, ref1, rtol=1e-5, atol=1e-5), (out1, ref1)

    # Case 2: odd batch, forced small tile -> multi-tile, single shard,
    # ragged last block masked in-kernel (no wrapper padding).
    N2, C2 = 50, 128
    y2 = jax.nn.softmax(jax.random.normal(keys[2], (N2, C2), jnp.float32), axis=1)
    p2 = jax.random.normal(keys[3], (N2, C2), jnp.float32)
    out2 = jax.block_until_ready(
        supervised_soft_label_loss(y2, p2, max_tile_n=8))
    ref2 = _reference_loss(y2, p2)
    assert jnp.allclose(out2, ref2, rtol=1e-5, atol=1e-5), (out2, ref2)

    # Case 3: two-shard path (even tile count) with a ragged last block.
    N3, C3 = 60, 128
    y3 = jax.nn.softmax(jax.random.normal(keys[4], (N3, C3), jnp.float32), axis=1)
    p3 = jax.random.normal(keys[5], (N3, C3), jnp.float32)
    out3 = jax.block_until_ready(
        supervised_soft_label_loss(y3, p3, max_tile_n=8))
    ref3 = _reference_loss(y3, p3)
    assert jnp.allclose(out3, ref3, rtol=1e-5, atol=1e-5), (out3, ref3)

    # Case 4: bf16 inputs, two shards, no mask (math is f32 in both paths).
    N4, C4 = 64, 256
    y4 = jax.nn.softmax(jax.random.normal(keys[6], (N4, C4), jnp.float32), axis=1)
    p4 = jax.random.normal(keys[7], (N4, C4), jnp.float32)
    y4b, p4b = y4.astype(jnp.bfloat16), p4.astype(jnp.bfloat16)
    out4 = jax.block_until_ready(
        supervised_soft_label_loss(y4b, p4b, max_tile_n=16))
    ref4 = _reference_loss(y4b.astype(jnp.float32), p4b.astype(jnp.float32))
    assert jnp.allclose(out4, ref4, rtol=1e-4, atol=1e-4), (out4, ref4)

    print("KERNEL_OK")
</pallas_src>

<mosaic_0001>
module attributes {stable_mosaic.version = 11 : i64} {
  func.func @_soft_label_loss_kernel(%arg0: i32, %arg1: i32, %arg2: memref<16x128xf32, #tpu.memory_space<vmem>>, %arg3: memref<16x128xf32, #tpu.memory_space<vmem>>, %arg4: memref<1x8x128xf32, #tpu.memory_space<vmem>>) attributes {dimension_semantics = [#tpu.dimension_semantics<parallel>, #tpu.dimension_semantics<arbitrary>], iteration_bounds = array<i64: 1, 1>, scalar_prefetch = 0 : i64, scratch_operands = 0 : i64, tpu.core_type = #tpu.core_type<tc>, window_params = [{transform_indices = @transform_0, window_bounds = array<i64: 16, 128>}, {transform_indices = @transform_1, window_bounds = array<i64: 16, 128>}, {transform_indices = @transform_2, window_bounds = array<i64: 1, 8, 128>}]} {
    %c0_i32 = arith.constant 0 : i32
    %0 = arith.cmpi eq, %arg1, %c0_i32 : i32
    %1 = arith.extui %0 : i1 to i32
    %c0_i32_0 = arith.constant 0 : i32
    %2 = arith.cmpi ne, %1, %c0_i32_0 : i32
    scf.if %2 {
      %cst_13 = arith.constant 0.000000e+00 : f32
      %24 = vector.broadcast %cst_13 : f32 to vector<8x128xf32>
      %c0_14 = arith.constant 0 : index
      %c0_15 = arith.constant 0 : index
      %c0_16 = arith.constant 0 : index
      %25 = vector.load %arg4[%c0_14, %c0_15, %c0_16] : memref<1x8x128xf32, #tpu.memory_space<vmem>>, vector<1x8x128xf32>
      %26 = vector.shape_cast %25 : vector<1x8x128xf32> to vector<8x128xf32>
      %27 = vector.shape_cast %24 : vector<8x128xf32> to vector<1x8x128xf32>
      tpu.vector_store %arg4[%c0_14, %c0_15, %c0_16], %27 {strides = array<i32>} : memref<1x8x128xf32, #tpu.memory_space<vmem>>, vector<1x8x128xf32>,
    } else {
    }
    %c0 = arith.constant 0 : index
    %c0_1 = arith.constant 0 : index
    %3 = vector.load %arg3[%c0, %c0_1] : memref<16x128xf32, #tpu.memory_space<vmem>>, vector<16x128xf32>
    %cst = arith.constant dense<0xFF800000> : vector<16xf32>
    %4 = vector.multi_reduction <maximumf>, %3, %cst [1] : vector<16x128xf32> to vector<16xf32>
    %5 = vector.shape_cast %4 : vector<16xf32> to vector<16x1xf32>
    %6 = vector.broadcast %5 : vector<16x1xf32> to vector<16x128xf32>
    %7 = arith.subf %3, %6 : vector<16x128xf32>
    %8 = math.exp %7 : vector<16x128xf32>
    %cst_2 = arith.constant 1.000000e+00 : f32
    %9 = vector.broadcast %cst_2 : f32 to vector<128x1xf32>
    %cst_3 = arith.constant dense<0.000000e+00> : vector<16x1xf32>
    %10 = tpu.matmul %8, %9, %cst_3 {dimension_numbers = #tpu.dot_dimension_numbers<[1], [0], [0], [1], [0, 0, 1, 1], [], []>, precision = #tpu.contract_precision<fp32>} : vector<16x128xf32>, vector<128x1xf32>, vector<16x1xf32> -> vector<16x1xf32>
    %11 = math.log %10 : vector<16x1xf32>
    %c0_4 = arith.constant 0 : index
    %c0_5 = arith.constant 0 : index
    %12 = vector.load %arg2[%c0_4, %c0_5] : memref<16x128xf32, #tpu.memory_space<vmem>>, vector<16x128xf32>
    %13 = vector.broadcast %11 : vector<16x1xf32> to vector<16x128xf32>
    %14 = arith.subf %13, %7 : vector<16x128xf32>
    %15 = arith.mulf %12, %14 : vector<16x128xf32>
    %16 = vector.shape_cast %15 : vector<16x128xf32> to vector<2x8x128xf32>
    %cst_6 = arith.constant dense<0.000000e+00> : vector<8x128xf32>
    %17 = vector.multi_reduction <add>, %16, %cst_6 [0] : vector<2x8x128xf32> to vector<8x128xf32>
    %c0_7 = arith.constant 0 : index
    %c0_8 = arith.constant 0 : index
    %c0_9 = arith.constant 0 : index
    %18 = vector.load %arg4[%c0_7, %c0_8, %c0_9] : memref<1x8x128xf32, #tpu.memory_space<vmem>>, vector<1x8x128xf32>
    %19 = vector.shape_cast %18 : vector<1x8x128xf32> to vector<8x128xf32>
    %20 = arith.addf %19, %17 : vector<8x128xf32>
    %c0_10 = arith.constant 0 : index
    %c0_11 = arith.constant 0 : index
    %c0_12 = arith.constant 0 : index
    %21 = vector.load %arg4[%c0_10, %c0_11, %c0_12] : memref<1x8x128xf32, #tpu.memory_space<vmem>>, vector<1x8x128xf32>
    %22 = vector.shape_cast %21 : vector<1x8x128xf32> to vector<8x128xf32>
    %23 = vector.shape_cast %20 : vector<8x128xf32> to vector<1x8x128xf32>
    tpu.vector_store %arg4[%c0_10, %c0_11, %c0_12], %23 {strides = array<i32>} : memref<1x8x128xf32, #tpu.memory_space<vmem>>, vector<1x8x128xf32>,
    return
  }
  func.func @transform_0(%arg0: i32, %arg1: i32) -> (i32, i32) {
    %c1_i32 = arith.constant 1 : i32
    %0 = arith.muli %arg0, %c1_i32 : i32
    %1 = arith.addi %0, %arg1 : i32
    %c0_i32 = arith.constant 0 : i32
    %c0_i32_0 = arith.constant 0 : i32
    return %1, %c0_i32 : i32, i32
  }
  func.func @transform_1(%arg0: i32, %arg1: i32) -> (i32, i32) {
    %c1_i32 = arith.constant 1 : i32
    %0 = arith.muli %arg0, %c1_i32 : i32
    %1 = arith.addi %0, %arg1 : i32
    %c0_i32 = arith.constant 0 : i32
    %c0_i32_0 = arith.constant 0 : i32
    return %1, %c0_i32 : i32, i32
  }
  func.func @transform_2(%arg0: i32, %arg1: i32) -> (i32, i32, i32) {
    %c0_i32 = arith.constant 0 : i32
    %c0_i32_0 = arith.constant 0 : i32
    %c0_i32_1 = arith.constant 0 : i32
    return %arg0, %c0_i32, %c0_i32_0 : i32, i32, i32
  }
}

</mosaic_0001>

<llo_original>
// kernel: tpu_custom_call.1
$region0: #{tpu_custom_call.1}
  #allocation0 [shape = 'u32[]', space=smem, size = 0x4, offset = 0x4, fixed_abs, tag = 'smem constant byte address 0x4 - core index']
  #allocation1 [shape = 'u32[72,128]{1,0:T(1,128)}', space=vmem, size = 0x9000, scoped, tag = 'internal scratch']
  %s0 = inlined_call_operand.hbm [shape: f32[16,128], index: 0, kind: input, shape index: {}]
  %s1 = inlined_call_operand.hbm [shape: f32[16,128], index: 1, kind: input, shape index: {}]
  %s2 = inlined_call_operand.hbm [shape: f32[1,8,128], index: 2, kind: output, shape index: {}]
  %s3 = sld [smem:[#allocation0]]
  $region30: #{tpu_custom_call.1} parent=0
    _
  %s5 = ssub.s32 1, %s3
  %s6 = scalar_select 0, %s5, %s3
  $region1: #{tpu_custom_call.1} parent=0
    #allocation2 [shape = 'u8[8192]{0}', space=vmem, size = 0x2000, scoped, tag = 'input window, operand 0, single buffered']
    #allocation3 [shape = 's32[1]{0}', space=sflag, size = 0x4, scoped, tag = 'scoped memory for tpu_custom_call.1']
    #allocation4 [shape = 's32[1]{0}', space=sflag, size = 0x4, scoped, tag = 'scoped memory for tpu_custom_call.1']
    #allocation5 [shape = 'u8[8192]{0}', space=vmem, size = 0x2000, scoped, tag = 'input window, operand 1, single buffered']
    #allocation6 [shape = 's32[1]{0}', space=sflag, size = 0x4, scoped, tag = 'scoped memory for tpu_custom_call.1']
    #allocation7 [shape = 'u8[4096]{0}', space=vmem, size = 0x1000, scoped, tag = 'output window, operand 0, single buffered']
    %7 = vsyncpa [#allocation3], 0
    %8 = vsyncpa [#allocation6], 0
    %9 = vsyncpa [#allocation4], 0
    // Predicated region
    $region2: #{tpu_custom_call.1} parent=1 // pred_check
      _
    $region3: #{tpu_custom_call.1} parent=1 // pred_check_branch
      %11 = sbr.rel (0) target = $region5
    $region4: #{tpu_custom_call.1} parent=1 // pred_region
      %s12 = sadd.s32 0, 0
      %s13 = smul.u32 2, %s12
      %15 = vsyncadd [#allocation3], 0
      %s16 = smul.addr %s13, 8
      %s17 = scalar_lea.hbm %s0, %s16
      %s18 = sshll.u32 %s17, 4
      %s19 = int_to_ptr.hbm [resolvable:$true] %s18
      %s20 = sshll.u32 [#allocation2], 4
      %s21 = int_to_ptr.vmem [resolvable:$true] %s20
      %26 = dma.hbm_to_vmem [thread:$0]  %s19, 256, %s21, [#allocation3], 128, 128, 8
    $region5: #{tpu_custom_call.1} parent=1 // pred_fallthru
      _
    // Predicated region
    $region6: #{tpu_custom_call.1} parent=1 // pred_check
      _
    $region7: #{tpu_custom_call.1} parent=1 // pred_check_branch
      %28 = sbr.rel (0) target = $region9
    $region8: #{tpu_custom_call.1} parent=1 // pred_region
      %s29 = sadd.s32 0, 0
      %s30 = smul.u32 2, %s29
      %32 = vsyncadd [#allocation6], 0
      %s33 = smul.addr %s30, 8
      %s34 = scalar_lea.hbm %s1, %s33
      %s35 = sshll.u32 %s34, 4
      %s36 = int_to_ptr.hbm [resolvable:$true] %s35
      %s37 = sshll.u32 [#allocation5], 4
      %s38 = int_to_ptr.vmem [resolvable:$true] %s37
      %43 = dma.hbm_to_vmem [thread:$0]  %s36, 256, %s38, [#allocation6], 128, 128, 8
    $region9: #{tpu_custom_call.1} parent=1 // pred_fallthru
      _
    // Predicated region
    $region10: #{tpu_custom_call.1} parent=1 // pred_check
      _
    $region11: #{tpu_custom_call.1} parent=1 // pred_check_branch
      %45 = sbr.rel (0) target = $region13
    $region12: #{tpu_custom_call.1} parent=1 // pred_region
      %47 = dma.done [#allocation3], 256
    $region13: #{tpu_custom_call.1} parent=1 // pred_fallthru
      _
    // Predicated region
    $region14: #{tpu_custom_call.1} parent=1 // pred_check
      _
    $region15: #{tpu_custom_call.1} parent=1 // pred_check_branch
      %49 = sbr.rel (0) target = $region17
    $region16: #{tpu_custom_call.1} parent=1 // pred_region
      %51 = dma.done [#allocation6], 256
    $region17: #{tpu_custom_call.1} parent=1 // pred_fallthru
      _
    %s52 = sadd.s32 0, 0
    %s53 = smul.u32 2, %s52
    %s54 = sadd.s32 0, 0
    %s55 = smul.u32 2, %s54
    %p56 = scmp.eq.s32.totalorder 0, 0
    // Predicated region
    $region18: #{tpu_custom_call.1} parent=1 // pred_check
      %p57 = pneg %p56
    $region19: #{tpu_custom_call.1} parent=1 // pred_check_branch
      %59 = sbr.rel (%p57) target = $region21
    $region20: #{tpu_custom_call.1} parent=1 // pred_region
      %60 = vst [vmem:[#allocation7] sm:$0xff] 0.0
    $region21: #{tpu_custom_call.1} parent=1 // pred_fallthru
      _
    %v61 = vld [vmem:[#allocation5] sm:$0xff]
    %v62 = vld [vmem:[#allocation5 + $0x8] sm:$0xff]
    %63 = vmax.xlane.f32.xlu0 %v61
    %v64 = vpop.xlane.xlu0 %63
    %65 = vmax.xlane.f32.xlu0 %v62
    %v66 = vpop.xlane.xlu0 %65
    %v67 = vsub.f32 %v61, %v64
    %v68 = vsub.f32 %v62, %v66
    %v69 = vmul.f32 %v67, 1.442695
    %v70 = vpow.pop %v69
    %v71 = vmul.f32 %v68, 1.442695
    %v72 = vpow.pop %v71
    %73 = vmatpush.msra.mxu0 1.0
    %74 = vmatpush.msra.mxu0 1.0
    %75 = vmatpush.msra.mxu0 1.0
    %76 = vmatpush.msra.mxu0 1.0
    %77 = vmatpush.msra.mxu0 1.0
    %78 = vmatpush.msra.mxu0 1.0
    %79 = vmatpush.msra.mxu0 1.0
    %80 = vmatpush.msra.mxu0 1.0
    %81 = vmatpush.msra.mxu0 1.0
    %82 = vmatpush.msra.mxu0 1.0
    %83 = vmatpush.msra.mxu0 1.0
    %84 = vmatpush.msra.mxu0 1.0
    %85 = vmatpush.msra.mxu0 1.0
    %86 = vmatpush.msra.mxu0 1.0
    %87 = vmatpush.msra.mxu0 1.0
    %88 = vmatpush.msra.mxu0 1.0
    %v89 = vand.u32 %v70, 4294901760
    %v90 = vsub.f32 %v70, %v89
    %v91 = vand.u32 %v90, 4294901760
    %v92 = vsub.f32 %v90, %v91
    %v93 = vand.u32 %v92, 4294901760
    %94 = vmatmul.f32.gmra.mxu0 %v93
    %v95 = vpop.f32.mrf.mxu0
    %v96 = vadd.f32 0.0, %v95
    %v97 = vand.u32 %v72, 4294901760
    %v98 = vsub.f32 %v72, %v97
    %v99 = vand.u32 %v98, 4294901760
    %v100 = vsub.f32 %v98, %v99
    %v101 = vand.u32 %v100, 4294901760
    %102 = vmatmul.f32.gmra.mxu0 %v101
    %v103 = vpop.f32.mrf.mxu0
    %v104 = vadd.f32 0.0, %v103
    %105 = vdwg.mxu0
    %106 = vmatpush.msra.mxu0 0.0
    %107 = vmatpush.msra.mxu0 0.0
    %108 = vmatpush.msra.mxu0 0.0
    %109 = vmatpush.msra.mxu0 0.0
    %110 = vmatpush.msra.mxu0 0.0
    %111 = vmatpush.msra.mxu0 0.0
    %112 = vmatpush.msra.mxu0 0.0
    %113 = vmatpush.msra.mxu0 0.0
    %114 = vmatpush.msra.mxu0 0.0
    %115 = vmatpush.msra.mxu0 0.0
    %116 = vmatpush.msra.mxu0 0.0
    %117 = vmatpush.msra.mxu0 0.0
    %118 = vmatpush.msra.mxu0 0.0
    %119 = vmatpush.msra.mxu0 0.0
    %120 = vmatpush.msra.mxu0 0.0
    %121 = vmatpush.msra.mxu0 0.0
    %v122 = vand.u32 %v70, 4294901760
    %123 = vmatmul.f32.gmra.mxu0 %v122
    %v124 = vpop.f32.mrf.mxu0
    %v125 = vadd.f32 %v96, %v124
    %v126 = vand.u32 %v72, 4294901760
    %127 = vmatmul.f32.gmra.mxu0 %v126
    %v128 = vpop.f32.mrf.mxu0
    %v129 = vadd.f32 %v104, %v128
    %130 = vdwg.mxu0
    %131 = vmatpush.msra.mxu0 0.0
    %132 = vmatpush.msra.mxu0 0.0
    %133 = vmatpush.msra.mxu0 0.0
    %134 = vmatpush.msra.mxu0 0.0
    %135 = vmatpush.msra.mxu0 0.0
    %136 = vmatpush.msra.mxu0 0.0
    %137 = vmatpush.msra.mxu0 0.0
    %138 = vmatpush.msra.mxu0 0.0
    %139 = vmatpush.msra.mxu0 0.0
    %140 = vmatpush.msra.mxu0 0.0
    %141 = vmatpush.msra.mxu0 0.0
    %142 = vmatpush.msra.mxu0 0.0
    %143 = vmatpush.msra.mxu0 0.0
    %144 = vmatpush.msra.mxu0 0.0
    %145 = vmatpush.msra.mxu0 0.0
    %146 = vmatpush.msra.mxu0 0.0
    %v147 = vand.u32 %v70, 4294901760
    %v148 = vsub.f32 %v70, %v147
    %149 = vmatmul.f32.gmra.mxu0 %v148
    %v150 = vpop.f32.mrf.mxu0
    %v151 = vadd.f32 %v125, %v150
    %v152 = vand.u32 %v72, 4294901760
    %v153 = vsub.f32 %v72, %v152
    %154 = vmatmul.f32.gmra.mxu0 %v153
    %v155 = vpop.f32.mrf.mxu0
    %v156 = vadd.f32 %v129, %v155
    %157 = vdwg.mxu0
    %158 = vmatpush.msra.mxu0 1.0
    %159 = vmatpush.msra.mxu0 1.0
    %160 = vmatpush.msra.mxu0 1.0
    %161 = vmatpush.msra.mxu0 1.0
    %162 = vmatpush.msra.mxu0 1.0
    %163 = vmatpush.msra.mxu0 1.0
    %164 = vmatpush.msra.mxu0 1.0
    %165 = vmatpush.msra.mxu0 1.0
    %166 = vmatpush.msra.mxu0 1.0
    %167 = vmatpush.msra.mxu0 1.0
    %168 = vmatpush.msra.mxu0 1.0
    %169 = vmatpush.msra.mxu0 1.0
    %170 = vmatpush.msra.mxu0 1.0
    %171 = vmatpush.msra.mxu0 1.0
    %172 = vmatpush.msra.mxu0 1.0
    %173 = vmatpush.msra.mxu0 1.0
    %v174 = vand.u32 %v70, 4294901760
    %v175 = vsub.f32 %v70, %v174
    %v176 = vand.u32 %v175, 4294901760
    %177 = vmatmul.f32.gmra.mxu0 %v176
    %v178 = vpop.f32.mrf.mxu0
    %v179 = vadd.f32 %v151, %v178
    %v180 = vand.u32 %v72, 4294901760
    %v181 = vsub.f32 %v72, %v180
    %v182 = vand.u32 %v181, 4294901760
    %183 = vmatmul.f32.gmra.mxu0 %v182
    %v184 = vpop.f32.mrf.mxu0
    %v185 = vadd.f32 %v156, %v184
    %186 = vdwg.mxu0
    %187 = vmatpush.msra.mxu0 0.0
    %188 = vmatpush.msra.mxu0 0.0
    %189 = vmatpush.msra.mxu0 0.0
    %190 = vmatpush.msra.mxu0 0.0
    %191 = vmatpush.msra.mxu0 0.0
    %192 = vmatpush.msra.mxu0 0.0
    %193 = vmatpush.msra.mxu0 0.0
    %194 = vmatpush.msra.mxu0 0.0
    %195 = vmatpush.msra.mxu0 0.0
    %196 = vmatpush.msra.mxu0 0.0
    %197 = vmatpush.msra.mxu0 0.0
    %198 = vmatpush.msra.mxu0 0.0
    %199 = vmatpush.msra.mxu0 0.0
    %200 = vmatpush.msra.mxu0 0.0
    %201 = vmatpush.msra.mxu0 0.0
    %202 = vmatpush.msra.mxu0 0.0
    %v203 = vand.u32 %v70, 4294901760
    %204 = vmatmul.f32.gmra.mxu0 %v203
    %v205 = vpop.f32.mrf.mxu0
    %v206 = vadd.f32 %v179, %v205
    %v207 = vand.u32 %v72, 4294901760
    %208 = vmatmul.f32.gmra.mxu0 %v207
    %v209 = vpop.f32.mrf.mxu0
    %v210 = vadd.f32 %v185, %v209
    %211 = vdwg.mxu0
    %212 = vmatpush.msra.mxu0 1.0
    %213 = vmatpush.msra.mxu0 1.0
    %214 = vmatpush.msra.mxu0 1.0
    %215 = vmatpush.msra.mxu0 1.0
    %216 = vmatpush.msra.mxu0 1.0
    %217 = vmatpush.msra.mxu0 1.0
    %218 = vmatpush.msra.mxu0 1.0
    %219 = vmatpush.msra.mxu0 1.0
    %220 = vmatpush.msra.mxu0 1.0
    %221 = vmatpush.msra.mxu0 1.0
    %222 = vmatpush.msra.mxu0 1.0
    %223 = vmatpush.msra.mxu0 1.0
    %224 = vmatpush.msra.mxu0 1.0
    %225 = vmatpush.msra.mxu0 1.0
    %226 = vmatpush.msra.mxu0 1.0
    %227 = vmatpush.msra.mxu0 1.0
    %v228 = vand.u32 %v70, 4294901760
    %229 = vmatmul.f32.gmra.mxu0 %v228
    %v230 = vpop.f32.mrf.mxu0
    %v231 = vadd.f32 %v206, %v230
    %v232 = vand.u32 %v72, 4294901760
    %233 = vmatmul.f32.gmra.mxu0 %v232
    %v234 = vpop.f32.mrf.mxu0
    %v235 = vadd.f32 %v210, %v234
    %236 = vdwg.mxu0
    %v237 = vlog2.pop %v231
    %v238 = vmul.f32 %v237, 0.6931472
    %v239 = vlog2.pop %v235
    %v240 = vmul.f32 %v239, 0.6931472
    %v241 = vld [vmem:[#allocation2] sm:$0xff]
    %v242 = vld [vmem:[#allocation2 + $0x8] sm:$0xff]
    %244 = vset.pattern.permute.xlu0 0
    %245 = vperm.xlu0 %244, %v238
    %v246 = vpop.permute.xlu0 %245
    %249 = vset.pattern.permute.xlu0 0
    %250 = vperm.xlu0 %249, %v240
    %v251 = vpop.permute.xlu0 %250
    %v253 = vsub.f32 %v246, %v67
    %v254 = vsub.f32 %v251, %v68
    %v255 = vmul.f32 %v241, %v253
    %v256 = vmul.f32 %v242, %v254
    %v257 = vadd.f32 %v255, %v256
    %v258 = vld [vmem:[#allocation7] sm:$0xff]
    %v259 = vadd.f32 %v258, %v257
    %260 = vst [vmem:[#allocation7] sm:$0xff] %v259
    // Predicated region
    $region22: #{tpu_custom_call.1} parent=1 // pred_check
      _
    $region23: #{tpu_custom_call.1} parent=1 // pred_check_branch
      %262 = sbr.rel (0) target = $region25
    $region24: #{tpu_custom_call.1} parent=1 // pred_region
      %264 = vsyncadd [#allocation4], 0
      %s266 = sshll.u32 [#allocation7], 4
      %s267 = int_to_ptr.vmem [resolvable:$true] %s266
      %s268 = sshll.u32 %s2, 4
      %s269 = int_to_ptr.hbm [resolvable:$true] %s268
      %271 = dma.vmem_to_hbm [thread:$0]  %s267, 128, %s269, [#allocation4]
    $region25: #{tpu_custom_call.1} parent=1 // pred_fallthru
      _
    // Predicated region
    $region26: #{tpu_custom_call.1} parent=1 // pred_check
      _
    $region27: #{tpu_custom_call.1} parent=1 // pred_check_branch
      %273 = sbr.rel (0) target = $region29
    $region28: #{tpu_custom_call.1} parent=1 // pred_region
      %275 = dma.done [#allocation4], 128
    $region29: #{tpu_custom_call.1} parent=1 // pred_fallthru
      _
    %276 = vsyncpa [#allocation3], 1
    %277 = vsyncpa [#allocation6], 1
    %278 = vsyncpa [#allocation4], 1

</llo_original>
